<compile_context>
chip_gen: v6e
topology: v6e:2x2x1
jax: 0.10.0
libtpu: 0.0.40
codegen_flags: <defaults>
</compile_context>

<pallas_src>
import functools

import jax
import jax.numpy as jnp
from jax import lax
from jax.experimental import pallas as pl
from jax.experimental.pallas import tpu as pltpu

_EPS = 1e-12            # F.normalize default eps
_EPS2 = _EPS * _EPS     # rsqrt(max(ss, eps^2)) == 1 / max(||x||, eps)

# Per-buffer VMEM byte budgets (double-buffered by the Pallas pipeline).
_W_TILE_BYTES = 8 * 1024 * 1024     # streamed weight tile
_OUT_TILE_BYTES = 6 * 1024 * 1024   # output tile
_X_TILE_BYTES = 4 * 1024 * 1024     # resident image-embedding tile
_VMEM_LIMIT_BYTES = 48 * 1024 * 1024


def _prompt_similarity_kernel(x_ref, w_ref, *rest, use_bias: bool):
    if use_bias:
        b_ref, o_ref, xn_ref = rest
    else:
        o_ref, xn_ref = rest

    # L2-normalize the image-embedding tile ONCE per B tile (first P step) and
    # keep it resident in a VMEM scratch; every subsequent P step only does the
    # MXU matmul against the freshly streamed weight tile.
    @pl.when(pl.program_id(1) == 0)
    def _():
        x32 = x_ref[...].astype(jnp.float32)                       # (TB, D)
        inv_x = lax.rsqrt(
            jnp.maximum(jnp.sum(x32 * x32, axis=1, keepdims=True), _EPS2))
        xn_ref[...] = (x32 * inv_x).astype(xn_ref.dtype)

    # F.linear(x_n, w) == x_n @ w.T -> contract both operands on their lane
    # (feature) axis directly; no transpose of the weight tile, f32 accumulator.
    out = lax.dot_general(
        xn_ref[...], w_ref[...],
        dimension_numbers=(((1,), (1,)), ((), ())),
        preferred_element_type=jnp.float32)                        # (TB, TP)

    if use_bias:
        out = out + b_ref[...].astype(jnp.float32)                 # (1, TP) bcast

    o_ref[...] = out.astype(o_ref.dtype)


def prompt_similarity(image_embedding: jax.Array,
                      weight: jax.Array,
                      bias: jax.Array | None = None,
                      normalized_weights: bool = False,
                      stream_weights_in_bf16: bool = False,
                      tile_p: int | None = None,
                      tile_b: int | None = None) -> jax.Array:
    """Pallas-backed forward pass of PromptSimilarity.

    stream_weights_in_bf16: cast f32 weights to bf16 once before streaming them
      through the kernel (halves the dominant HBM traffic; scores then carry
      bf16-level rounding, use a looser tolerance).
    tile_p / tile_b: optional tile-size overrides (testing / tuning).
    """
    B, D = image_embedding.shape
    P, D2 = weight.shape
    assert D == D2, "feature dims must match"
    use_bias = bias is not None
    out_dtype = image_embedding.dtype

    # --- weight preprocessing (hoisted out of the kernel) ---------------------
    w_use = weight
    if normalized_weights:
        # NOTE: for a static prompt head, normalize once at init instead of per
        # forward call; done here (outside the kernel) so it is not re-executed
        # for every streamed weight tile.
        w32 = w_use.astype(jnp.float32)
        inv_w = lax.rsqrt(
            jnp.maximum(jnp.sum(w32 * w32, axis=1, keepdims=True), _EPS2))
        w_use = (w32 * inv_w).astype(weight.dtype)
    if stream_weights_in_bf16 and w_use.dtype == jnp.float32:
        w_use = w_use.astype(jnp.bfloat16)

    # MXU-operand dtype for the normalized image embeddings: bf16 if the weight
    # stream is bf16 (keeps the MXU in bf16 mode), else the input dtype.
    xn_dtype = jnp.bfloat16 if w_use.dtype == jnp.bfloat16 else image_embedding.dtype

    # --- tile sizing from VMEM byte budgets ------------------------------------
    x_row_bytes = D * image_embedding.dtype.itemsize
    w_row_bytes = D * w_use.dtype.itemsize
    out_itemsize = jnp.dtype(out_dtype).itemsize

    if tile_b is not None:
        TB = tile_b
    else:
        TB = B if B <= 1024 else 1024
        max_tb = max(8, (_X_TILE_BYTES // max(x_row_bytes, 1)) // 8 * 8)
        if TB > max_tb:
            TB = max_tb                              # multiple of 8

    if tile_p is not None:
        TP = tile_p
    else:
        tp_from_w = _W_TILE_BYTES // max(w_row_bytes, 1)
        tp_from_out = _OUT_TILE_BYTES // max(TB * out_itemsize, 1)
        tp = max(128, (min(tp_from_w, tp_from_out) // 128) * 128)  # lane-dense
        TP = P if P <= tp else tp

    grid = (pl.cdiv(B, TB), pl.cdiv(P, TP))

    in_specs = [
        pl.BlockSpec((TB, D), lambda bi, pj: (bi, 0)),    # x tile (resident per bi)
        pl.BlockSpec((TP, D), lambda bi, pj: (pj, 0)),    # weight tile (streamed)
    ]
    args = [image_embedding, w_use]
    if use_bias:
        in_specs.append(pl.BlockSpec((1, TP), lambda bi, pj: (0, pj)))
        args.append(bias.reshape(1, P))

    kernel = functools.partial(_prompt_similarity_kernel, use_bias=use_bias)

    return pl.pallas_call(
        kernel,
        out_shape=jax.ShapeDtypeStruct((B, P), out_dtype),
        grid=grid,
        in_specs=in_specs,
        out_specs=pl.BlockSpec((TB, TP), lambda bi, pj: (bi, pj)),
        scratch_shapes=[pltpu.VMEM((TB, D), xn_dtype)],   # hoisted x_n
        compiler_params=pltpu.CompilerParams(
            # B tiles are independent -> "parallel" (v7x megacore); the P axis
            # carries the x_n scratch across steps -> "arbitrary".
            dimension_semantics=("parallel", "arbitrary"),
            vmem_limit_bytes=_VMEM_LIMIT_BYTES,
        ),
    )(*args)


def _l2_normalize(x, axis):
    n = jnp.sqrt(jnp.sum(x * x, axis=axis, keepdims=True))
    return x / jnp.maximum(n, _EPS)


if __name__ == "__main__":
    key = jax.random.PRNGKey(0)
    k_prompt, k_img = jax.random.split(key)

    # Small deterministic setup: batch=8, hidden=32, num_prompts=8.
    B, D, P = 8, 32, 8
    prompt_embeddings = jax.random.normal(k_prompt, (P, D), dtype=jnp.float32)
    image_embedding = jax.random.normal(k_img, (B, D), dtype=jnp.float32)

    # Module __init__: weight = F.normalize(prompt_embeddings, dim=1).
    weight = _l2_normalize(prompt_embeddings, axis=1)
    x_n = _l2_normalize(image_embedding, axis=1)

    # --- case 1: defaults (bias=False, normalized_weights=False) --------------
    out = prompt_similarity(image_embedding, weight,
                            bias=None, normalized_weights=False)
    out = jax.block_until_ready(out)
    ref = x_n @ weight.T
    assert out.shape == (B, P)
    assert jnp.allclose(out, ref, atol=1e-5, rtol=1e-5)

    # --- case 2: bias=True, normalized_weights=True ----------------------------
    bias = jax.random.normal(jax.random.PRNGKey(1), (P,), dtype=jnp.float32)
    out2 = prompt_similarity(image_embedding, weight,
                             bias=bias, normalized_weights=True)
    out2 = jax.block_until_ready(out2)
    ref2 = x_n @ _l2_normalize(weight, axis=1).T + bias[None, :]
    assert jnp.allclose(out2, ref2, atol=1e-5, rtol=1e-5)

    # --- case 3: multi-tile grid (exercises the hoisted x_n scratch path) ------
    B3, D3, P3 = 16, 32, 256
    w3 = _l2_normalize(jax.random.normal(jax.random.PRNGKey(2), (P3, D3),
                                         dtype=jnp.float32), axis=1)
    x3 = jax.random.normal(jax.random.PRNGKey(3), (B3, D3), dtype=jnp.float32)
    out3 = jax.block_until_ready(
        prompt_similarity(x3, w3, bias=None, normalized_weights=False,
                          tile_p=128, tile_b=8))               # grid = (2, 2)
    ref3 = _l2_normalize(x3, axis=1) @ w3.T
    assert jnp.allclose(out3, ref3, atol=1e-5, rtol=1e-5)

    # --- case 4: bf16 weight streaming (looser tolerance, documented) ----------
    out4 = jax.block_until_ready(
        prompt_similarity(image_embedding, weight, bias=None,
                          normalized_weights=False, stream_weights_in_bf16=True))
    assert jnp.allclose(out4, ref, atol=3e-2, rtol=3e-2)

    print("KERNEL_OK")
</pallas_src>

<mosaic_0001>
module attributes {stable_mosaic.version = 11 : i64} {
  func.func @_prompt_similarity_kernel(%arg0: i32, %arg1: i32, %arg2: memref<8x32xf32, #tpu.memory_space<vmem>>, %arg3: memref<8x32xf32, #tpu.memory_space<vmem>>, %arg4: memref<8x8xf32, #tpu.memory_space<vmem>>, %arg5: memref<8x32xf32, #tpu.memory_space<vmem>>) attributes {dimension_semantics = [#tpu.dimension_semantics<parallel>, #tpu.dimension_semantics<arbitrary>], iteration_bounds = array<i64: 1, 1>, scalar_prefetch = 0 : i64, scratch_operands = 1 : i64, tpu.core_type = #tpu.core_type<tc>, window_params = [{transform_indices = @transform_0, window_bounds = array<i64: 8, 32>}, {transform_indices = @transform_1, window_bounds = array<i64: 8, 32>}, {transform_indices = @transform_2, window_bounds = array<i64: 8, 8>}]} {
    %c0_i32 = arith.constant 0 : i32
    %0 = arith.cmpi eq, %arg1, %c0_i32 : i32
    %1 = arith.extui %0 : i1 to i32
    %c0_i32_0 = arith.constant 0 : i32
    %2 = arith.cmpi ne, %1, %c0_i32_0 : i32
    scf.if %2 {
      %c0_6 = arith.constant 0 : index
      %c0_7 = arith.constant 0 : index
      %7 = vector.load %arg2[%c0_6, %c0_7] : memref<8x32xf32, #tpu.memory_space<vmem>>, vector<8x32xf32>
      %8 = arith.mulf %7, %7 : vector<8x32xf32>
      %cst_8 = arith.constant dense<0.000000e+00> : vector<8xf32>
      %9 = vector.multi_reduction <add>, %8, %cst_8 [1] : vector<8x32xf32> to vector<8xf32>
      %10 = vector.shape_cast %9 : vector<8xf32> to vector<8x1xf32>
      %cst_9 = arith.constant 1.000000e-24 : f32
      %11 = vector.broadcast %cst_9 : f32 to vector<8x1xf32>
      %12 = arith.maximumf %10, %11 : vector<8x1xf32>
      %13 = math.rsqrt %12 : vector<8x1xf32>
      %14 = vector.broadcast %13 : vector<8x1xf32> to vector<8x32xf32>
      %15 = arith.mulf %7, %14 : vector<8x32xf32>
      %c0_10 = arith.constant 0 : index
      %c0_11 = arith.constant 0 : index
      %16 = vector.load %arg5[%c0_10, %c0_11] : memref<8x32xf32, #tpu.memory_space<vmem>>, vector<8x32xf32>
      tpu.vector_store %arg5[%c0_10, %c0_11], %15 {strides = array<i32>} : memref<8x32xf32, #tpu.memory_space<vmem>>, vector<8x32xf32>,
    } else {
    }
    %c0 = arith.constant 0 : index
    %c0_1 = arith.constant 0 : index
    %3 = vector.load %arg5[%c0, %c0_1] : memref<8x32xf32, #tpu.memory_space<vmem>>, vector<8x32xf32>
    %c0_2 = arith.constant 0 : index
    %c0_3 = arith.constant 0 : index
    %4 = vector.load %arg3[%c0_2, %c0_3] : memref<8x32xf32, #tpu.memory_space<vmem>>, vector<8x32xf32>
    %cst = arith.constant dense<0.000000e+00> : vector<8x8xf32>
    %5 = tpu.matmul %3, %4, %cst {dimension_numbers = #tpu.dot_dimension_numbers<[1], [1], [0], [0], [0, 0, 1, 0], [], []>} : vector<8x32xf32>, vector<8x32xf32>, vector<8x8xf32> -> vector<8x8xf32>
    %c0_4 = arith.constant 0 : index
    %c0_5 = arith.constant 0 : index
    %6 = vector.load %arg4[%c0_4, %c0_5] : memref<8x8xf32, #tpu.memory_space<vmem>>, vector<8x8xf32>
    tpu.vector_store %arg4[%c0_4, %c0_5], %5 {strides = array<i32>} : memref<8x8xf32, #tpu.memory_space<vmem>>, vector<8x8xf32>,
    return
  }
  func.func @transform_0(%arg0: i32, %arg1: i32) -> (i32, i32) {
    %c0_i32 = arith.constant 0 : i32
    %c0_i32_0 = arith.constant 0 : i32
    return %arg0, %c0_i32 : i32, i32
  }
  func.func @transform_1(%arg0: i32, %arg1: i32) -> (i32, i32) {
    %c0_i32 = arith.constant 0 : i32
    %c0_i32_0 = arith.constant 0 : i32
    return %arg1, %c0_i32 : i32, i32
  }
  func.func @transform_2(%arg0: i32, %arg1: i32) -> (i32, i32) {
    %c0_i32 = arith.constant 0 : i32
    return %arg0, %arg1 : i32, i32
  }
}

</mosaic_0001>

<llo_original>
// kernel: tpu_custom_call.1
$region0: #{tpu_custom_call.1}
  #allocation0 [shape = 'u32[]', space=smem, size = 0x4, offset = 0x4, fixed_abs, tag = 'smem constant byte address 0x4 - core index']
  #allocation1 [shape = 'u32[144,128]{1,0:T(1,128)}', space=vmem, size = 0x12000, scoped, tag = 'internal scratch']
  #allocation2 [shape = 'f32[8,32]{1,0:T(8,128)}', space=vmem, size = 0x1000, scoped, tag = 'scratch operand']
  %s0 = inlined_call_operand.hbm [shape: f32[8,32], index: 0, kind: input, shape index: {}]
  %s1 = inlined_call_operand.hbm [shape: f32[8,32], index: 1, kind: input, shape index: {}]
  %s2 = inlined_call_operand.hbm [shape: f32[8,8], index: 2, kind: output, shape index: {}]
  %s3 = sld [smem:[#allocation0]]
  $region30: #{tpu_custom_call.1} parent=0
    _
  %s5 = ssub.s32 1, %s3
  %s6 = scalar_select 0, %s5, %s3
  $region1: #{tpu_custom_call.1} parent=0
    #allocation3 [shape = 'u8[4096]{0}', space=vmem, size = 0x1000, scoped, tag = 'input window, operand 0, single buffered']
    #allocation4 [shape = 's32[1]{0}', space=sflag, size = 0x4, scoped, tag = 'scoped memory for tpu_custom_call.1']
    #allocation5 [shape = 's32[1]{0}', space=sflag, size = 0x4, scoped, tag = 'scoped memory for tpu_custom_call.1']
    #allocation6 [shape = 'u8[4096]{0}', space=vmem, size = 0x1000, scoped, tag = 'input window, operand 1, single buffered']
    #allocation7 [shape = 's32[1]{0}', space=sflag, size = 0x4, scoped, tag = 'scoped memory for tpu_custom_call.1']
    #allocation8 [shape = 'u8[4096]{0}', space=vmem, size = 0x1000, scoped, tag = 'output window, operand 0, single buffered']
    %7 = vsyncpa [#allocation4], 0
    %8 = vsyncpa [#allocation7], 0
    %9 = vsyncpa [#allocation5], 0
    // Predicated region
    $region2: #{tpu_custom_call.1} parent=1 // pred_check
      _
    $region3: #{tpu_custom_call.1} parent=1 // pred_check_branch
      %11 = sbr.rel (0) target = $region5
    $region4: #{tpu_custom_call.1} parent=1 // pred_region
      %s13 = ssub.s32 128, 128
      %14 = vsyncadd [#allocation4], %s13
      %s16 = sshll.u32 [#allocation3], 4
      %s17 = int_to_ptr.vmem [resolvable:$true] %s16
      %19 = dma.hbm_to_vmem [thread:$0]  %s0, 128, %s17, [#allocation4]
    $region5: #{tpu_custom_call.1} parent=1 // pred_fallthru
      _
    // Predicated region
    $region6: #{tpu_custom_call.1} parent=1 // pred_check
      _
    $region7: #{tpu_custom_call.1} parent=1 // pred_check_branch
      %21 = sbr.rel (0) target = $region9
    $region8: #{tpu_custom_call.1} parent=1 // pred_region
      %s23 = ssub.s32 128, 128
      %24 = vsyncadd [#allocation7], %s23
      %s26 = sshll.u32 [#allocation6], 4
      %s27 = int_to_ptr.vmem [resolvable:$true] %s26
      %29 = dma.hbm_to_vmem [thread:$0]  %s1, 128, %s27, [#allocation7]
    $region9: #{tpu_custom_call.1} parent=1 // pred_fallthru
      _
    // Predicated region
    $region10: #{tpu_custom_call.1} parent=1 // pred_check
      _
    $region11: #{tpu_custom_call.1} parent=1 // pred_check_branch
      %31 = sbr.rel (0) target = $region13
    $region12: #{tpu_custom_call.1} parent=1 // pred_region
      %32 = dma.done [#allocation4], 128
    $region13: #{tpu_custom_call.1} parent=1 // pred_fallthru
      _
    // Predicated region
    $region14: #{tpu_custom_call.1} parent=1 // pred_check
      _
    $region15: #{tpu_custom_call.1} parent=1 // pred_check_branch
      %34 = sbr.rel (0) target = $region17
    $region16: #{tpu_custom_call.1} parent=1 // pred_region
      %35 = dma.done [#allocation7], 128
    $region17: #{tpu_custom_call.1} parent=1 // pred_fallthru
      _
    %p36 = scmp.eq.s32.totalorder 0, 0
    // Predicated region
    $region18: #{tpu_custom_call.1} parent=1 // pred_check
      %p37 = pneg %p36
    $region19: #{tpu_custom_call.1} parent=1 // pred_check_branch
      %39 = sbr.rel (%p37) target = $region21
    $region20: #{tpu_custom_call.1} parent=1 // pred_region
      %v40 = vld [vmem:[#allocation3] sm:$0xff]
      %v41 = vmul.f32 %v40, %v40
      %vm42 = vcmask 261120
      %v43 = vsel %vm42, %v41, 0.0
      %44 = vadd.xlane.f32.xlu0 %v43
      %v45 = vpop.xlane.xlu0 %44
      %v46 = vmax.f32 %v45, 1e-24
      %v47 = vrsqrt.pop %v46
      %v48 = vmul.f32 %v40, %v47
      %49 = vst.msk [vmem:[#allocation2] sm:$0xff] %vm42, %v48
    $region21: #{tpu_custom_call.1} parent=1 // pred_fallthru
      _
    %v50 = vld [vmem:[#allocation2] sm:$0xff]
    %v51 = vld [vmem:[#allocation6] sm:$0xff]
    %vm52 = vcmask 261120
    %v54 = vsel %vm52, %v50, 0
    %v57 = vsel %vm52, %v51, 0
    %59 = vmatprep.subr.mxu0 0.0
    %60 = vmatpush1.xpose.msra.mxu0 0.0
    %61 = vmatprep.subr.mxu0 0.0
    %62 = vmatpush1.xpose.msra.mxu0 0.0
    %63 = vmatprep.subr.mxu0 0.0
    %64 = vmatpush1.xpose.msra.mxu0 0.0
    %65 = vmatprep.subr.mxu0 0.0
    %66 = vmatpush1.xpose.msra.mxu0 0.0
    %67 = vmatprep.subr.mxu0 0.0
    %68 = vmatpush1.xpose.msra.mxu0 0.0
    %69 = vmatprep.subr.mxu0 0.0
    %70 = vmatpush1.xpose.msra.mxu0 0.0
    %71 = vmatprep.subr.mxu0 0.0
    %72 = vmatpush1.xpose.msra.mxu0 0.0
    %73 = vmatprep.subr.mxu0 0.0
    %74 = vmatpush1.xpose.msra.mxu0 0.0
    %75 = vmatprep.subr.mxu0 0.0
    %76 = vmatpush1.xpose.msra.mxu0 0.0
    %77 = vmatprep.subr.mxu0 0.0
    %78 = vmatpush1.xpose.msra.mxu0 0.0
    %79 = vmatprep.subr.mxu0 0.0
    %80 = vmatpush1.xpose.msra.mxu0 0.0
    %81 = vmatprep.subr.mxu0 0.0
    %82 = vmatpush1.xpose.msra.mxu0 0.0
    %83 = vmatprep.subr.mxu0 0.0
    %84 = vmatpush1.xpose.msra.mxu0 0.0
    %85 = vmatprep.subr.mxu0 0.0
    %86 = vmatpush1.xpose.msra.mxu0 0.0
    %87 = vmatprep.subr.mxu0 0.0
    %88 = vmatpush1.xpose.msra.mxu0 0.0
    %89 = vmatprep.subr.mxu0 0.0
    %90 = vmatpush1.xpose.msra.mxu0 %v57
    %91 = vmatprep.subr.mxu0 0.0
    %92 = vmatpush2.xpose.msra.mxu0 0.0
    %93 = vmatprep.subr.mxu0 0.0
    %94 = vmatpush2.xpose.msra.mxu0 0.0
    %95 = vmatprep.subr.mxu0 0.0
    %96 = vmatpush2.xpose.msra.mxu0 0.0
    %97 = vmatprep.subr.mxu0 0.0
    %98 = vmatpush2.xpose.msra.mxu0 0.0
    %99 = vmatprep.subr.mxu0 0.0
    %100 = vmatpush2.xpose.msra.mxu0 0.0
    %101 = vmatprep.subr.mxu0 0.0
    %102 = vmatpush2.xpose.msra.mxu0 0.0
    %103 = vmatprep.subr.mxu0 0.0
    %104 = vmatpush2.xpose.msra.mxu0 0.0
    %105 = vmatprep.subr.mxu0 0.0
    %106 = vmatpush2.xpose.msra.mxu0 0.0
    %107 = vmatprep.subr.mxu0 0.0
    %108 = vmatpush2.xpose.msra.mxu0 0.0
    %109 = vmatprep.subr.mxu0 0.0
    %110 = vmatpush2.xpose.msra.mxu0 0.0
    %111 = vmatprep.subr.mxu0 0.0
    %112 = vmatpush2.xpose.msra.mxu0 0.0
    %113 = vmatprep.subr.mxu0 0.0
    %114 = vmatpush2.xpose.msra.mxu0 0.0
    %115 = vmatprep.subr.mxu0 0.0
    %116 = vmatpush2.xpose.msra.mxu0 0.0
    %117 = vmatprep.subr.mxu0 0.0
    %118 = vmatpush2.xpose.msra.mxu0 0.0
    %119 = vmatprep.subr.mxu0 0.0
    %120 = vmatpush2.xpose.msra.mxu0 0.0
    %121 = vmatprep.subr.mxu0 0.0
    %122 = vmatpush2.xpose.msra.mxu0 0.0
    %123 = vmatprep.mubr.f32.mxu0 0.0
    %124 = vmatmul.mubr.f32.gmra.mxu0 %v54
    %v125 = vpop.f32.mrf.mxu0
    %v126 = vadd.f32 0.0, %v125
    %v127 = vpop.f32.mrf.mxu0
    %128 = vdwg.mxu0
    %vm129 = vcmask 64512
    %130 = vst.msk [vmem:[#allocation8] sm:$0xff] %vm129, %v126
    // Predicated region
    $region22: #{tpu_custom_call.1} parent=1 // pred_check
      _
    $region23: #{tpu_custom_call.1} parent=1 // pred_check_branch
      %132 = sbr.rel (0) target = $region25
    $region24: #{tpu_custom_call.1} parent=1 // pred_region
      %s134 = ssub.s32 128, 128
      %135 = vsyncadd [#allocation5], %s134
      %s137 = sshll.u32 [#allocation8], 4
      %s138 = int_to_ptr.vmem [resolvable:$true] %s137
      %140 = dma.vmem_to_hbm [thread:$0]  %s138, 128, %s2, [#allocation5]
    $region25: #{tpu_custom_call.1} parent=1 // pred_fallthru
      _
    // Predicated region
    $region26: #{tpu_custom_call.1} parent=1 // pred_check
      _
    $region27: #{tpu_custom_call.1} parent=1 // pred_check_branch
      %142 = sbr.rel (0) target = $region29
    $region28: #{tpu_custom_call.1} parent=1 // pred_region
      %143 = dma.done [#allocation5], 128
    $region29: #{tpu_custom_call.1} parent=1 // pred_fallthru
      _
    %144 = vsyncpa [#allocation4], 1
    %145 = vsyncpa [#allocation7], 1
    %146 = vsyncpa [#allocation5], 1

</llo_original>
